<compile_context>
chip_gen: v7x
topology: tpu7x:2x2x1
jax: 0.10.0
libtpu: 0.0.40
codegen_flags: <defaults>
</compile_context>

<pallas_src>
import numpy as np
import jax
import jax.numpy as jnp
from jax.experimental import pallas as pl
from jax.experimental.pallas import tpu as pltpu

BIN_COUNT = 10  # module's self.bin_count

# x falls in bin k of round(tanh(x)*BIN_COUNT)  <=>
#   atanh((k-0.5)/BIN_COUNT) <= x < atanh((k+0.5)/BIN_COUNT); top edge = +inf.
_TANH_EDGES = tuple(float(np.arctanh((k - 0.5) / BIN_COUNT))
                    for k in range(BIN_COUNT + 1))

_VMEM_LIMIT = 48 << 20  # safe on v5e/v6e (128 MiB VMEM) and v7x (64 MiB / TC)


# ---------------------------------------------------------------------------
# Stats kernel: per-(b,c) score = entropy + 2 / (var + 1e-7)
# ---------------------------------------------------------------------------
def _stats_kernel(x_ref, score_ref):
    x = x_ref[...].astype(jnp.float32)          # (TM, hw), upcast in-register
    n = x.shape[1]

    # torch.var over (h, w) is unbiased (ddof=1); two-pass for stability.
    # TODO(synk): h*w == 1 gives inf/NaN in torch; the max() guard keeps it finite.
    mean = jnp.sum(x, axis=1, keepdims=True) * (1.0 / float(n))
    d = x - mean
    var = jnp.sum(d * d, axis=1, keepdims=True) * (1.0 / float(max(n - 1, 1)))

    # Histogram of round(tanh(x)*10) over bins 0..10 without tanh/round:
    # CDF counts s_k = #{x >= atanh((k-0.5)/10)}, bin counts c_k = s_k - s_{k+1},
    # s_11 = 0 (tanh < 1.05 always), total T = sum_k c_k = s_0.
    s = [jnp.sum((x >= t).astype(jnp.float32), axis=1, keepdims=True)
         for t in _TANH_EDGES]
    total = s[0]
    c_logc = jnp.zeros_like(total)
    for k in range(BIN_COUNT + 1):
        ck = (s[k] - s[k + 1]) if k < BIN_COUNT else s[k]
        c_logc = c_logc + ck * jnp.log(jnp.where(ck > 0, ck, 1.0))

    # Categorical(hist).entropy() == log(T) - (1/T) * sum_k c_k log c_k
    # (NaN when T == 0, same as torch).
    ent = jnp.log(total) - c_logc / total

    # Score writeback is 1/hw of the input traffic, so the narrow (TM, 1)
    # column store is nowhere near this kernel's bottleneck.
    score_ref[...] = ent + 2.0 / (var + 1e-7)


# ---------------------------------------------------------------------------
# Conv kernel: per-channel identity / Laplace via separable band matmuls
# ---------------------------------------------------------------------------
def _conv_kernel(mask_ref, bh_ref, bw_ref, x_ref, o_ref):
    x = x_ref[...].astype(jnp.float32)          # (TC, h, w)
    tc, h, w = x.shape
    # ns = Bh @ X @ Bw : exact zero-padded 3x3 neighborhood sum, kept in f32.
    # (reshapes are layout-trivial when h, w are multiples of 8; otherwise
    #  Mosaic relayouts them.)
    t1 = jnp.dot(x.reshape(tc * h, w), bw_ref[...],
                 preferred_element_type=jnp.float32).reshape(tc, h, w)
    t1 = jnp.swapaxes(t1, 1, 2)                                  # (TC, w, h)
    t2 = jnp.dot(t1.reshape(tc * w, h), bh_ref[...],
                 preferred_element_type=jnp.float32).reshape(tc, w, h)
    ns = jnp.swapaxes(t2, 1, 2)                                  # (TC, h, w)
    # identity: x ; laplace: 9x - ns  =>  blend with per-channel mask m in {0,1}.
    o_ref[...] = (x + mask_ref[...] * (8.0 * x - ns)).astype(o_ref.dtype)


# ---------------------------------------------------------------------------
# Tile sizing
# ---------------------------------------------------------------------------
def _pick_block_rows(n_rows, bytes_per_row, target_bytes, tiny_bytes=2 << 20):
    """Rows per block: biggest block <= target_bytes, but keep >= 2 grid steps
    (so the BlockSpec pipeline overlaps DMA with compute) unless the whole slab
    is tiny; multiples of 8 rows.  Modest targets keep the double-buffered
    blocks + f32 intermediates inside every generation's scoped-VMEM budget."""
    if n_rows * bytes_per_row <= tiny_bytes or n_rows <= 8:
        return int(n_rows)
    rows = min(target_bytes // max(bytes_per_row, 1), (n_rows + 1) // 2)
    rows = max(8, (rows // 8) * 8)
    return int(min(rows, n_rows))


def heuristic_dropout_forward(x, rate=0.1, training=True):
    """Forward pass of HeuristicDropoutWithAlternativeRound (training mode)."""
    if not training:
        return x
    b, c, h, w = x.shape
    bc, hw = b * c, h * w
    itemsize = jnp.dtype(x.dtype).itemsize

    # ---- stats kernel: native dtype in, f32 per-channel score out -----------
    x_rows = x.reshape(bc, hw)
    tm = _pick_block_rows(bc, hw * itemsize, target_bytes=4 << 20)
    score = pl.pallas_call(
        _stats_kernel,
        out_shape=jax.ShapeDtypeStruct((bc, 1), jnp.float32),
        grid=(pl.cdiv(bc, tm),),
        in_specs=[pl.BlockSpec((tm, hw), lambda i: (i, 0))],
        out_specs=pl.BlockSpec((tm, 1), lambda i: (i, 0)),
        compiler_params=pltpu.CompilerParams(
            dimension_semantics=("parallel",),
            vmem_limit_bytes=_VMEM_LIMIT),
    )(x_rows)
    score = score.reshape(b, c)

    # ---- glue: top round(rate*c) channels per batch get the Laplace filter --
    k = int(round(rate * c))
    mask = jnp.zeros((b, c), jnp.float32)
    if k > 0:
        _, sel = jax.lax.top_k(score, k)   # ties -> lower index (stable-sort order)
        mask = mask.at[jnp.arange(b)[:, None], sel].set(1.0)
    mask3 = mask.reshape(bc, 1, 1)

    # ---- conv kernel: separable 3x3 neighborhood sum + per-channel blend ----
    bh = jnp.asarray((np.abs(np.arange(h)[:, None] - np.arange(h)[None, :]) <= 1)
                     .astype(np.float32))
    bw = jnp.asarray((np.abs(np.arange(w)[:, None] - np.arange(w)[None, :]) <= 1)
                     .astype(np.float32))
    # Budget with the f32, lane-padded footprint of one channel (w pads to 128).
    row_bytes = h * (pl.cdiv(w, 128) * 128) * 4
    tc = _pick_block_rows(bc, row_bytes, target_bytes=1 << 20)
    x3 = x.reshape(bc, h, w)
    out = pl.pallas_call(
        _conv_kernel,
        out_shape=jax.ShapeDtypeStruct((bc, h, w), x.dtype),
        grid=(pl.cdiv(bc, tc),),
        in_specs=[pl.BlockSpec((tc, 1, 1), lambda i: (i, 0, 0)),   # per-channel mask
                  pl.BlockSpec((h, h), lambda i: (0, 0)),          # Bh band (tiny)
                  pl.BlockSpec((w, w), lambda i: (0, 0)),          # Bw band (tiny)
                  pl.BlockSpec((tc, h, w), lambda i: (i, 0, 0))],  # channel block
        out_specs=pl.BlockSpec((tc, h, w), lambda i: (i, 0, 0)),
        compiler_params=pltpu.CompilerParams(
            dimension_semantics=("parallel",),
            vmem_limit_bytes=_VMEM_LIMIT),
    )(mask3, bh, bw, x3)
    # TODO(synk): for spatial maps too large for a single-channel (h, w) f32
    # block in VMEM, switch to a roll-based shift-and-add with halo'd tiling.
    return out.reshape(b, c, h, w)


# ---------------------------------------------------------------------------
# Pure-numpy (float64) reference of the PyTorch forward (training mode)
# ---------------------------------------------------------------------------
def _reference(xn, rate=0.1):
    xn = np.asarray(xn, dtype=np.float64)
    b, c, h, w = xn.shape
    var = xn.reshape(b, c, -1).var(axis=2, ddof=1)
    q = np.round(np.tanh(xn) * BIN_COUNT).reshape(b, c, -1)
    hist = np.stack([(q == kk).sum(axis=2) for kk in range(BIN_COUNT + 1)],
                    axis=-1).astype(np.float64)
    total = hist.sum(axis=-1, keepdims=True)
    p = hist / total
    plogp = np.where(hist > 0, p * np.log(np.where(p > 0, p, 1.0)), 0.0)
    ent = -plogp.sum(axis=-1)
    score = ent + 2.0 / (var + 1e-7)
    k = round(rate * c)
    order = np.argsort(-score, axis=1, kind="stable")   # stable descending
    xp = np.pad(xn, ((0, 0), (0, 0), (1, 1), (1, 1)))
    ns = np.zeros_like(xn)
    for di in range(3):
        for dj in range(3):
            ns = ns + xp[:, :, di:di + h, dj:dj + w]
    lap = 9.0 * xn - ns
    out = xn.copy()
    for bi in range(b):
        for ci in order[bi, :k]:
            out[bi, ci] = lap[bi, ci]
    return out


if __name__ == "__main__":
    key = jax.random.PRNGKey(0)
    b, c, h, w = 2, 16, 16, 16   # round(0.1 * 16) = 2 channels per batch -> Laplace
    x = jax.random.normal(key, (b, c, h, w), dtype=jnp.float32)

    out = heuristic_dropout_forward(x, rate=0.1, training=True)
    out = jax.block_until_ready(out)

    ref = _reference(np.asarray(x), rate=0.1)
    np.testing.assert_allclose(np.asarray(out, dtype=np.float64), ref,
                               rtol=1e-4, atol=1e-3)
    print("KERNEL_OK")
</pallas_src>

<mosaic_0001>
module attributes {stable_mosaic.version = 11 : i64} {
  func.func @_stats_kernel(%arg0: i32, %arg1: memref<32x256xf32, #tpu.memory_space<vmem>>, %arg2: memref<32x1xf32, #tpu.memory_space<vmem>>) attributes {dimension_semantics = [#tpu.dimension_semantics<parallel>], iteration_bounds = array<i64: 1>, scalar_prefetch = 0 : i64, scratch_operands = 0 : i64, tpu.core_type = #tpu.core_type<tc>, window_params = [{transform_indices = @transform_0, window_bounds = array<i64: 32, 256>}, {transform_indices = @transform_1, window_bounds = array<i64: 32, 1>}]} {
    %c0 = arith.constant 0 : index
    %c0_0 = arith.constant 0 : index
    %0 = vector.load %arg1[%c0, %c0_0] : memref<32x256xf32, #tpu.memory_space<vmem>>, vector<32x256xf32>
    %cst = arith.constant dense<0.000000e+00> : vector<32xf32>
    %1 = vector.multi_reduction <add>, %0, %cst [1] : vector<32x256xf32> to vector<32xf32>
    %2 = vector.shape_cast %1 : vector<32xf32> to vector<32x1xf32>
    %cst_1 = arith.constant 3.906250e-03 : f32
    %3 = vector.broadcast %cst_1 : f32 to vector<32x1xf32>
    %4 = arith.mulf %2, %3 : vector<32x1xf32>
    %5 = vector.broadcast %4 : vector<32x1xf32> to vector<32x256xf32>
    %6 = arith.subf %0, %5 : vector<32x256xf32>
    %7 = arith.mulf %6, %6 : vector<32x256xf32>
    %cst_2 = arith.constant dense<0.000000e+00> : vector<32xf32>
    %8 = vector.multi_reduction <add>, %7, %cst_2 [1] : vector<32x256xf32> to vector<32xf32>
    %9 = vector.shape_cast %8 : vector<32xf32> to vector<32x1xf32>
    %cst_3 = arith.constant 0.00392156886 : f32
    %10 = vector.broadcast %cst_3 : f32 to vector<32x1xf32>
    %11 = arith.mulf %9, %10 : vector<32x1xf32>
    %cst_4 = arith.constant -0.0500417277 : f32
    %12 = vector.broadcast %cst_4 : f32 to vector<32x256xf32>
    %13 = arith.cmpf oge, %0, %12 : vector<32x256xf32>
    %14 = arith.extui %13 : vector<32x256xi1> to vector<32x256xi32>
    %15 = arith.sitofp %14 : vector<32x256xi32> to vector<32x256xf32>
    %cst_5 = arith.constant dense<0.000000e+00> : vector<32xf32>
    %16 = vector.multi_reduction <add>, %15, %cst_5 [1] : vector<32x256xf32> to vector<32xf32>
    %17 = vector.shape_cast %16 : vector<32xf32> to vector<32x1xf32>
    %cst_6 = arith.constant 0.0500417277 : f32
    %18 = vector.broadcast %cst_6 : f32 to vector<32x256xf32>
    %19 = arith.cmpf oge, %0, %18 : vector<32x256xf32>
    %20 = arith.extui %19 : vector<32x256xi1> to vector<32x256xi32>
    %21 = arith.sitofp %20 : vector<32x256xi32> to vector<32x256xf32>
    %cst_7 = arith.constant dense<0.000000e+00> : vector<32xf32>
    %22 = vector.multi_reduction <add>, %21, %cst_7 [1] : vector<32x256xf32> to vector<32xf32>
    %23 = vector.shape_cast %22 : vector<32xf32> to vector<32x1xf32>
    %cst_8 = arith.constant 0.151140437 : f32
    %24 = vector.broadcast %cst_8 : f32 to vector<32x256xf32>
    %25 = arith.cmpf oge, %0, %24 : vector<32x256xf32>
    %26 = arith.extui %25 : vector<32x256xi1> to vector<32x256xi32>
    %27 = arith.sitofp %26 : vector<32x256xi32> to vector<32x256xf32>
    %cst_9 = arith.constant dense<0.000000e+00> : vector<32xf32>
    %28 = vector.multi_reduction <add>, %27, %cst_9 [1] : vector<32x256xf32> to vector<32xf32>
    %29 = vector.shape_cast %28 : vector<32xf32> to vector<32x1xf32>
    %cst_10 = arith.constant 0.255412817 : f32
    %30 = vector.broadcast %cst_10 : f32 to vector<32x256xf32>
    %31 = arith.cmpf oge, %0, %30 : vector<32x256xf32>
    %32 = arith.extui %31 : vector<32x256xi1> to vector<32x256xi32>
    %33 = arith.sitofp %32 : vector<32x256xi32> to vector<32x256xf32>
    %cst_11 = arith.constant dense<0.000000e+00> : vector<32xf32>
    %34 = vector.multi_reduction <add>, %33, %cst_11 [1] : vector<32x256xf32> to vector<32xf32>
    %35 = vector.shape_cast %34 : vector<32xf32> to vector<32x1xf32>
    %cst_12 = arith.constant 0.365443766 : f32
    %36 = vector.broadcast %cst_12 : f32 to vector<32x256xf32>
    %37 = arith.cmpf oge, %0, %36 : vector<32x256xf32>
    %38 = arith.extui %37 : vector<32x256xi1> to vector<32x256xi32>
    %39 = arith.sitofp %38 : vector<32x256xi32> to vector<32x256xf32>
    %cst_13 = arith.constant dense<0.000000e+00> : vector<32xf32>
    %40 = vector.multi_reduction <add>, %39, %cst_13 [1] : vector<32x256xf32> to vector<32xf32>
    %41 = vector.shape_cast %40 : vector<32xf32> to vector<32x1xf32>
    %cst_14 = arith.constant 0.484700292 : f32
    %42 = vector.broadcast %cst_14 : f32 to vector<32x256xf32>
    %43 = arith.cmpf oge, %0, %42 : vector<32x256xf32>
    %44 = arith.extui %43 : vector<32x256xi1> to vector<32x256xi32>
    %45 = arith.sitofp %44 : vector<32x256xi32> to vector<32x256xf32>
    %cst_15 = arith.constant dense<0.000000e+00> : vector<32xf32>
    %46 = vector.multi_reduction <add>, %45, %cst_15 [1] : vector<32x256xf32> to vector<32xf32>
    %47 = vector.shape_cast %46 : vector<32xf32> to vector<32x1xf32>
    %cst_16 = arith.constant 0.618381321 : f32
    %48 = vector.broadcast %cst_16 : f32 to vector<32x256xf32>
    %49 = arith.cmpf oge, %0, %48 : vector<32x256xf32>
    %50 = arith.extui %49 : vector<32x256xi1> to vector<32x256xi32>
    %51 = arith.sitofp %50 : vector<32x256xi32> to vector<32x256xf32>
    %cst_17 = arith.constant dense<0.000000e+00> : vector<32xf32>
    %52 = vector.multi_reduction <add>, %51, %cst_17 [1] : vector<32x256xf32> to vector<32xf32>
    %53 = vector.shape_cast %52 : vector<32xf32> to vector<32x1xf32>
    %cst_18 = arith.constant 0.775298714 : f32
    %54 = vector.broadcast %cst_18 : f32 to vector<32x256xf32>
    %55 = arith.cmpf oge, %0, %54 : vector<32x256xf32>
    %56 = arith.extui %55 : vector<32x256xi1> to vector<32x256xi32>
    %57 = arith.sitofp %56 : vector<32x256xi32> to vector<32x256xf32>
    %cst_19 = arith.constant dense<0.000000e+00> : vector<32xf32>
    %58 = vector.multi_reduction <add>, %57, %cst_19 [1] : vector<32x256xf32> to vector<32xf32>
    %59 = vector.shape_cast %58 : vector<32xf32> to vector<32x1xf32>
    %cst_20 = arith.constant 0.972955048 : f32
    %60 = vector.broadcast %cst_20 : f32 to vector<32x256xf32>
    %61 = arith.cmpf oge, %0, %60 : vector<32x256xf32>
    %62 = arith.extui %61 : vector<32x256xi1> to vector<32x256xi32>
    %63 = arith.sitofp %62 : vector<32x256xi32> to vector<32x256xf32>
    %cst_21 = arith.constant dense<0.000000e+00> : vector<32xf32>
    %64 = vector.multi_reduction <add>, %63, %cst_21 [1] : vector<32x256xf32> to vector<32xf32>
    %65 = vector.shape_cast %64 : vector<32xf32> to vector<32x1xf32>
    %cst_22 = arith.constant 1.25615287 : f32
    %66 = vector.broadcast %cst_22 : f32 to vector<32x256xf32>
    %67 = arith.cmpf oge, %0, %66 : vector<32x256xf32>
    %68 = arith.extui %67 : vector<32x256xi1> to vector<32x256xi32>
    %69 = arith.sitofp %68 : vector<32x256xi32> to vector<32x256xf32>
    %cst_23 = arith.constant dense<0.000000e+00> : vector<32xf32>
    %70 = vector.multi_reduction <add>, %69, %cst_23 [1] : vector<32x256xf32> to vector<32xf32>
    %71 = vector.shape_cast %70 : vector<32xf32> to vector<32x1xf32>
    %cst_24 = arith.constant 1.83178079 : f32
    %72 = vector.broadcast %cst_24 : f32 to vector<32x256xf32>
    %73 = arith.cmpf oge, %0, %72 : vector<32x256xf32>
    %74 = arith.extui %73 : vector<32x256xi1> to vector<32x256xi32>
    %75 = arith.sitofp %74 : vector<32x256xi32> to vector<32x256xf32>
    %cst_25 = arith.constant dense<0.000000e+00> : vector<32xf32>
    %76 = vector.multi_reduction <add>, %75, %cst_25 [1] : vector<32x256xf32> to vector<32xf32>
    %77 = vector.shape_cast %76 : vector<32xf32> to vector<32x1xf32>
    %cst_26 = arith.constant 0.000000e+00 : f32
    %78 = vector.broadcast %cst_26 : f32 to vector<32x1xf32>
    %79 = arith.subf %17, %23 : vector<32x1xf32>
    %cst_27 = arith.constant 0.000000e+00 : f32
    %80 = vector.broadcast %cst_27 : f32 to vector<32x1xf32>
    %81 = arith.cmpf ogt, %79, %80 : vector<32x1xf32>
    %cst_28 = arith.constant 1.000000e+00 : f32
    %82 = vector.broadcast %cst_28 : f32 to vector<32x1xf32>
    %83 = arith.select %81, %79, %82 : vector<32x1xi1>, vector<32x1xf32>
    %84 = math.log %83 : vector<32x1xf32>
    %85 = arith.mulf %79, %84 : vector<32x1xf32>
    %86 = arith.addf %78, %85 : vector<32x1xf32>
    %87 = arith.subf %23, %29 : vector<32x1xf32>
    %cst_29 = arith.constant 0.000000e+00 : f32
    %88 = vector.broadcast %cst_29 : f32 to vector<32x1xf32>
    %89 = arith.cmpf ogt, %87, %88 : vector<32x1xf32>
    %cst_30 = arith.constant 1.000000e+00 : f32
    %90 = vector.broadcast %cst_30 : f32 to vector<32x1xf32>
    %91 = arith.select %89, %87, %90 : vector<32x1xi1>, vector<32x1xf32>
    %92 = math.log %91 : vector<32x1xf32>
    %93 = arith.mulf %87, %92 : vector<32x1xf32>
    %94 = arith.addf %86, %93 : vector<32x1xf32>
    %95 = arith.subf %29, %35 : vector<32x1xf32>
    %cst_31 = arith.constant 0.000000e+00 : f32
    %96 = vector.broadcast %cst_31 : f32 to vector<32x1xf32>
    %97 = arith.cmpf ogt, %95, %96 : vector<32x1xf32>
    %cst_32 = arith.constant 1.000000e+00 : f32
    %98 = vector.broadcast %cst_32 : f32 to vector<32x1xf32>
    %99 = arith.select %97, %95, %98 : vector<32x1xi1>, vector<32x1xf32>
    %100 = math.log %99 : vector<32x1xf32>
    %101 = arith.mulf %95, %100 : vector<32x1xf32>
    %102 = arith.addf %94, %101 : vector<32x1xf32>
    %103 = arith.subf %35, %41 : vector<32x1xf32>
    %cst_33 = arith.constant 0.000000e+00 : f32
    %104 = vector.broadcast %cst_33 : f32 to vector<32x1xf32>
    %105 = arith.cmpf ogt, %103, %104 : vector<32x1xf32>
    %cst_34 = arith.constant 1.000000e+00 : f32
    %106 = vector.broadcast %cst_34 : f32 to vector<32x1xf32>
    %107 = arith.select %105, %103, %106 : vector<32x1xi1>, vector<32x1xf32>
    %108 = math.log %107 : vector<32x1xf32>
    %109 = arith.mulf %103, %108 : vector<32x1xf32>
    %110 = arith.addf %102, %109 : vector<32x1xf32>
    %111 = arith.subf %41, %47 : vector<32x1xf32>
    %cst_35 = arith.constant 0.000000e+00 : f32
    %112 = vector.broadcast %cst_35 : f32 to vector<32x1xf32>
    %113 = arith.cmpf ogt, %111, %112 : vector<32x1xf32>
    %cst_36 = arith.constant 1.000000e+00 : f32
    %114 = vector.broadcast %cst_36 : f32 to vector<32x1xf32>
    %115 = arith.select %113, %111, %114 : vector<32x1xi1>, vector<32x1xf32>
    %116 = math.log %115 : vector<32x1xf32>
    %117 = arith.mulf %111, %116 : vector<32x1xf32>
    %118 = arith.addf %110, %117 : vector<32x1xf32>
    %119 = arith.subf %47, %53 : vector<32x1xf32>
    %cst_37 = arith.constant 0.000000e+00 : f32
    %120 = vector.broadcast %cst_37 : f32 to vector<32x1xf32>
    %121 = arith.cmpf ogt, %119, %120 : vector<32x1xf32>
    %cst_38 = arith.constant 1.000000e+00 : f32
    %122 = vector.broadcast %cst_38 : f32 to vector<32x1xf32>
    %123 = arith.select %121, %119, %122 : vector<32x1xi1>, vector<32x1xf32>
    %124 = math.log %123 : vector<32x1xf32>
    %125 = arith.mulf %119, %124 : vector<32x1xf32>
    %126 = arith.addf %118, %125 : vector<32x1xf32>
    %127 = arith.subf %53, %59 : vector<32x1xf32>
    %cst_39 = arith.constant 0.000000e+00 : f32
    %128 = vector.broadcast %cst_39 : f32 to vector<32x1xf32>
    %129 = arith.cmpf ogt, %127, %128 : vector<32x1xf32>
    %cst_40 = arith.constant 1.000000e+00 : f32
    %130 = vector.broadcast %cst_40 : f32 to vector<32x1xf32>
    %131 = arith.select %129, %127, %130 : vector<32x1xi1>, vector<32x1xf32>
    %132 = math.log %131 : vector<32x1xf32>
    %133 = arith.mulf %127, %132 : vector<32x1xf32>
    %134 = arith.addf %126, %133 : vector<32x1xf32>
    %135 = arith.subf %59, %65 : vector<32x1xf32>
    %cst_41 = arith.constant 0.000000e+00 : f32
    %136 = vector.broadcast %cst_41 : f32 to vector<32x1xf32>
    %137 = arith.cmpf ogt, %135, %136 : vector<32x1xf32>
    %cst_42 = arith.constant 1.000000e+00 : f32
    %138 = vector.broadcast %cst_42 : f32 to vector<32x1xf32>
    %139 = arith.select %137, %135, %138 : vector<32x1xi1>, vector<32x1xf32>
    %140 = math.log %139 : vector<32x1xf32>
    %141 = arith.mulf %135, %140 : vector<32x1xf32>
    %142 = arith.addf %134, %141 : vector<32x1xf32>
    %143 = arith.subf %65, %71 : vector<32x1xf32>
    %cst_43 = arith.constant 0.000000e+00 : f32
    %144 = vector.broadcast %cst_43 : f32 to vector<32x1xf32>
    %145 = arith.cmpf ogt, %143, %144 : vector<32x1xf32>
    %cst_44 = arith.constant 1.000000e+00 : f32
    %146 = vector.broadcast %cst_44 : f32 to vector<32x1xf32>
    %147 = arith.select %145, %143, %146 : vector<32x1xi1>, vector<32x1xf32>
    %148 = math.log %147 : vector<32x1xf32>
    %149 = arith.mulf %143, %148 : vector<32x1xf32>
    %150 = arith.addf %142, %149 : vector<32x1xf32>
    %151 = arith.subf %71, %77 : vector<32x1xf32>
    %cst_45 = arith.constant 0.000000e+00 : f32
    %152 = vector.broadcast %cst_45 : f32 to vector<32x1xf32>
    %153 = arith.cmpf ogt, %151, %152 : vector<32x1xf32>
    %cst_46 = arith.constant 1.000000e+00 : f32
    %154 = vector.broadcast %cst_46 : f32 to vector<32x1xf32>
    %155 = arith.select %153, %151, %154 : vector<32x1xi1>, vector<32x1xf32>
    %156 = math.log %155 : vector<32x1xf32>
    %157 = arith.mulf %151, %156 : vector<32x1xf32>
    %158 = arith.addf %150, %157 : vector<32x1xf32>
    %cst_47 = arith.constant 0.000000e+00 : f32
    %159 = vector.broadcast %cst_47 : f32 to vector<32x1xf32>
    %160 = arith.cmpf ogt, %77, %159 : vector<32x1xf32>
    %cst_48 = arith.constant 1.000000e+00 : f32
    %161 = vector.broadcast %cst_48 : f32 to vector<32x1xf32>
    %162 = arith.select %160, %77, %161 : vector<32x1xi1>, vector<32x1xf32>
    %163 = math.log %162 : vector<32x1xf32>
    %164 = arith.mulf %77, %163 : vector<32x1xf32>
    %165 = arith.addf %158, %164 : vector<32x1xf32>
    %166 = math.log %17 : vector<32x1xf32>
    %167 = arith.divf %165, %17 : vector<32x1xf32>
    %168 = arith.subf %166, %167 : vector<32x1xf32>
    %cst_49 = arith.constant 1.000000e-07 : f32
    %169 = vector.broadcast %cst_49 : f32 to vector<32x1xf32>
    %170 = arith.addf %11, %169 : vector<32x1xf32>
    %cst_50 = arith.constant 2.000000e+00 : f32
    %171 = vector.broadcast %cst_50 : f32 to vector<32x1xf32>
    %172 = arith.divf %171, %170 : vector<32x1xf32>
    %173 = arith.addf %168, %172 : vector<32x1xf32>
    %c0_51 = arith.constant 0 : index
    %c0_52 = arith.constant 0 : index
    %174 = vector.load %arg2[%c0_51, %c0_52] : memref<32x1xf32, #tpu.memory_space<vmem>>, vector<32x1xf32>
    tpu.vector_store %arg2[%c0_51, %c0_52], %173 {strides = array<i32>} : memref<32x1xf32, #tpu.memory_space<vmem>>, vector<32x1xf32>,
    return
  }
  func.func @transform_0(%arg0: i32) -> (i32, i32) {
    %c0_i32 = arith.constant 0 : i32
    %c0_i32_0 = arith.constant 0 : i32
    return %arg0, %c0_i32 : i32, i32
  }
  func.func @transform_1(%arg0: i32) -> (i32, i32) {
    %c0_i32 = arith.constant 0 : i32
    %c0_i32_0 = arith.constant 0 : i32
    return %arg0, %c0_i32 : i32, i32
  }
}

</mosaic_0001>

<llo_original>
// kernel: tpu_custom_call.1
$region0: #{tpu_custom_call.1}
  #allocation0 [shape = 'u32[]', space=smem, size = 0x4, offset = 0x4, fixed_abs, tag = 'smem constant byte address 0x4 - core index']
  #allocation1 [shape = 'u32[144,128]{1,0:T(1,128)}', space=vmem, size = 0x12000, scoped, tag = 'internal scratch']
  %s0 = inlined_call_operand.hbm [shape: f32[32,256], index: 0, kind: input, shape index: {}]
  %s1 = inlined_call_operand.vmem [shape: f32[32,1], index: 1, kind: output, shape index: {}]
  %s2 = sld [smem:[#allocation0]]
  $region18: #{tpu_custom_call.1} parent=0
    _
  %s4 = ssub.s32 1, %s2
  %s5 = scalar_select 0, %s4, %s2
  $region1: #{tpu_custom_call.1} parent=0
    #allocation2 [shape = 'u8[32768]{0}', space=vmem, size = 0x8000, scoped, tag = 'input window, operand 0, single buffered']
    #allocation3 [shape = 's32[1]{0}', space=sflag, size = 0x4, scoped, tag = 'scoped memory for tpu_custom_call.1']
    %6 = vsyncpa [#allocation3], 0
    // Predicated region
    $region2: #{tpu_custom_call.1} parent=1 // pred_check
      _
    $region3: #{tpu_custom_call.1} parent=1 // pred_check_branch
      %8 = sbr.rel (0) target = $region5
    $region4: #{tpu_custom_call.1} parent=1 // pred_region
      %s10 = ssub.s32 1024, 1024
      %11 = vsyncadd [#allocation3], %s10
      %s12 = sshll.u32 [#allocation2], 4
      %s13 = int_to_ptr.vmem [resolvable:$true] %s12
      %18 = dma.hbm_to_vmem [thread:$0]  %s0, 1024, %s13, [#allocation3], 256, 256, 16
    $region5: #{tpu_custom_call.1} parent=1 // pred_fallthru
      _
    // Predicated region
    $region6: #{tpu_custom_call.1} parent=1 // pred_check
      _
    $region7: #{tpu_custom_call.1} parent=1 // pred_check_branch
      %20 = sbr.rel (0) target = $region9
    $region8: #{tpu_custom_call.1} parent=1 // pred_region
      %21 = dma.done [#allocation3], 1024
    $region9: #{tpu_custom_call.1} parent=1 // pred_fallthru
      _
    %v22 = vld [vmem:[#allocation2] sm:$0xff]
    %v23 = vld [vmem:[#allocation2 + $0x8] sm:$0xff]
    %v24 = vld [vmem:[#allocation2 + $0x10] sm:$0xff]
    %v25 = vld [vmem:[#allocation2 + $0x18] sm:$0xff]
    %v26 = vld [vmem:[#allocation2 + $0x20] sm:$0xff]
    %v27 = vld [vmem:[#allocation2 + $0x28] sm:$0xff]
    %v28 = vld [vmem:[#allocation2 + $0x30] sm:$0xff]
    %v29 = vld [vmem:[#allocation2 + $0x38] sm:$0xff]
    %v30 = vadd.f32 %v22, %v23
    %31 = vadd.xlane.f32.xlu0 %v30
    %v32 = vpop.xlane.xlu0 %31
    %v33 = vadd.f32 %v24, %v25
    %34 = vadd.xlane.f32.xlu0 %v33
    %v35 = vpop.xlane.xlu0 %34
    %v36 = vadd.f32 %v26, %v27
    %37 = vadd.xlane.f32.xlu0 %v36
    %v38 = vpop.xlane.xlu0 %37
    %v39 = vadd.f32 %v28, %v29
    %40 = vadd.xlane.f32.xlu0 %v39
    %v41 = vpop.xlane.xlu0 %40
    %v42 = vmul.f32 %v32, 0.00390625
    %v43 = vmul.f32 %v35, 0.00390625
    %v44 = vmul.f32 %v38, 0.00390625
    %v45 = vmul.f32 %v41, 0.00390625
    %v46 = vsub.f32 %v22, %v42
    %v47 = vsub.f32 %v23, %v42
    %v48 = vsub.f32 %v24, %v43
    %v49 = vsub.f32 %v25, %v43
    %v50 = vsub.f32 %v26, %v44
    %v51 = vsub.f32 %v27, %v44
    %v52 = vsub.f32 %v28, %v45
    %v53 = vsub.f32 %v29, %v45
    %v54 = vmul.f32 %v46, %v46
    %v55 = vmul.f32 %v47, %v47
    %v56 = vmul.f32 %v48, %v48
    %v57 = vmul.f32 %v49, %v49
    %v58 = vmul.f32 %v50, %v50
    %v59 = vmul.f32 %v51, %v51
    %v60 = vmul.f32 %v52, %v52
    %v61 = vmul.f32 %v53, %v53
    %v62 = vadd.f32 %v54, %v55
    %63 = vadd.xlane.f32.xlu0 %v62
    %v64 = vpop.xlane.xlu0 %63
    %v65 = vadd.f32 %v56, %v57
    %66 = vadd.xlane.f32.xlu0 %v65
    %v67 = vpop.xlane.xlu0 %66
    %v68 = vadd.f32 %v58, %v59
    %69 = vadd.xlane.f32.xlu0 %v68
    %v70 = vpop.xlane.xlu0 %69
    %v71 = vadd.f32 %v60, %v61
    %72 = vadd.xlane.f32.xlu0 %v71
    %v73 = vpop.xlane.xlu0 %72
    %v74 = vmul.f32 %v64, 0.003921569
    %v75 = vmul.f32 %v67, 0.003921569
    %v76 = vmul.f32 %v70, 0.003921569
    %v77 = vmul.f32 %v73, 0.003921569
    %vm78 = vcmp.ge.f32.partialorder %v22, -0.050041728
    %vm79 = vcmp.ge.f32.partialorder %v23, -0.050041728
    %vm80 = vcmp.ge.f32.partialorder %v24, -0.050041728
    %vm81 = vcmp.ge.f32.partialorder %v25, -0.050041728
    %vm82 = vcmp.ge.f32.partialorder %v26, -0.050041728
    %vm83 = vcmp.ge.f32.partialorder %v27, -0.050041728
    %vm84 = vcmp.ge.f32.partialorder %v28, -0.050041728
    %vm85 = vcmp.ge.f32.partialorder %v29, -0.050041728
    %v86 = vsel %vm78, 1, 0
    %v87 = vsel %vm79, 1, 0
    %v88 = vsel %vm80, 1, 0
    %v89 = vsel %vm81, 1, 0
    %v90 = vsel %vm82, 1, 0
    %v91 = vsel %vm83, 1, 0
    %v92 = vsel %vm84, 1, 0
    %v93 = vsel %vm85, 1, 0
    %v94 = vcvt.s32.f32 %v86
    %v95 = vcvt.s32.f32 %v87
    %v96 = vcvt.s32.f32 %v88
    %v97 = vcvt.s32.f32 %v89
    %v98 = vcvt.s32.f32 %v90
    %v99 = vcvt.s32.f32 %v91
    %v100 = vcvt.s32.f32 %v92
    %v101 = vcvt.s32.f32 %v93
    %v102 = vadd.f32 %v94, %v95
    %103 = vadd.xlane.f32.xlu0 %v102
    %v104 = vpop.xlane.xlu0 %103
    %v105 = vadd.f32 %v96, %v97
    %106 = vadd.xlane.f32.xlu0 %v105
    %v107 = vpop.xlane.xlu0 %106
    %v108 = vadd.f32 %v98, %v99
    %109 = vadd.xlane.f32.xlu0 %v108
    %v110 = vpop.xlane.xlu0 %109
    %v111 = vadd.f32 %v100, %v101
    %112 = vadd.xlane.f32.xlu0 %v111
    %v113 = vpop.xlane.xlu0 %112
    %vm114 = vcmp.ge.f32.partialorder %v22, 0.050041728
    %vm115 = vcmp.ge.f32.partialorder %v23, 0.050041728
    %vm116 = vcmp.ge.f32.partialorder %v24, 0.050041728
    %vm117 = vcmp.ge.f32.partialorder %v25, 0.050041728
    %vm118 = vcmp.ge.f32.partialorder %v26, 0.050041728
    %vm119 = vcmp.ge.f32.partialorder %v27, 0.050041728
    %vm120 = vcmp.ge.f32.partialorder %v28, 0.050041728
    %vm121 = vcmp.ge.f32.partialorder %v29, 0.050041728
    %v122 = vsel %vm114, 1, 0
    %v123 = vsel %vm115, 1, 0
    %v124 = vsel %vm116, 1, 0
    %v125 = vsel %vm117, 1, 0
    %v126 = vsel %vm118, 1, 0
    %v127 = vsel %vm119, 1, 0
    %v128 = vsel %vm120, 1, 0
    %v129 = vsel %vm121, 1, 0
    %v130 = vcvt.s32.f32 %v122
    %v131 = vcvt.s32.f32 %v123
    %v132 = vcvt.s32.f32 %v124
    %v133 = vcvt.s32.f32 %v125
    %v134 = vcvt.s32.f32 %v126
    %v135 = vcvt.s32.f32 %v127
    %v136 = vcvt.s32.f32 %v128
    %v137 = vcvt.s32.f32 %v129
    %v138 = vadd.f32 %v130, %v131
    %139 = vadd.xlane.f32.xlu0 %v138
    %v140 = vpop.xlane.xlu0 %139
    %v141 = vadd.f32 %v132, %v133
    %142 = vadd.xlane.f32.xlu0 %v141
    %v143 = vpop.xlane.xlu0 %142
    %v144 = vadd.f32 %v134, %v135
    %145 = vadd.xlane.f32.xlu0 %v144
    %v146 = vpop.xlane.xlu0 %145
    %v147 = vadd.f32 %v136, %v137
    %148 = vadd.xlane.f32.xlu0 %v147
    %v149 = vpop.xlane.xlu0 %148
    %vm150 = vcmp.ge.f32.partialorder %v22, 0.15114044
    %vm151 = vcmp.ge.f32.partialorder %v23, 0.15114044
    %vm152 = vcmp.ge.f32.partialorder %v24, 0.15114044
    %vm153 = vcmp.ge.f32.partialorder %v25, 0.15114044
    %vm154 = vcmp.ge.f32.partialorder %v26, 0.15114044
    %vm155 = vcmp.ge.f32.partialorder %v27, 0.15114044
    %vm156 = vcmp.ge.f32.partialorder %v28, 0.15114044
    %vm157 = vcmp.ge.f32.partialorder %v29, 0.15114044
    %v158 = vsel %vm150, 1, 0
    %v159 = vsel %vm151, 1, 0
    %v160 = vsel %vm152, 1, 0
    %v161 = vsel %vm153, 1, 0
    %v162 = vsel %vm154, 1, 0
    %v163 = vsel %vm155, 1, 0
    %v164 = vsel %vm156, 1, 0
    %v165 = vsel %vm157, 1, 0
    %v166 = vcvt.s32.f32 %v158
    %v167 = vcvt.s32.f32 %v159
    %v168 = vcvt.s32.f32 %v160
    %v169 = vcvt.s32.f32 %v161
    %v170 = vcvt.s32.f32 %v162
    %v171 = vcvt.s32.f32 %v163
    %v172 = vcvt.s32.f32 %v164
    %v173 = vcvt.s32.f32 %v165
    %v174 = vadd.f32 %v166, %v167
    %175 = vadd.xlane.f32.xlu0 %v174
    %v176 = vpop.xlane.xlu0 %175
    %v177 = vadd.f32 %v168, %v169
    %178 = vadd.xlane.f32.xlu0 %v177
    %v179 = vpop.xlane.xlu0 %178
    %v180 = vadd.f32 %v170, %v171
    %181 = vadd.xlane.f32.xlu0 %v180
    %v182 = vpop.xlane.xlu0 %181
    %v183 = vadd.f32 %v172, %v173
    %184 = vadd.xlane.f32.xlu0 %v183
    %v185 = vpop.xlane.xlu0 %184
    %vm186 = vcmp.ge.f32.partialorder %v22, 0.25541282
    %vm187 = vcmp.ge.f32.partialorder %v23, 0.25541282
    %vm188 = vcmp.ge.f32.partialorder %v24, 0.25541282
    %vm189 = vcmp.ge.f32.partialorder %v25, 0.25541282
    %vm190 = vcmp.ge.f32.partialorder %v26, 0.25541282
    %vm191 = vcmp.ge.f32.partialorder %v27, 0.25541282
    %vm192 = vcmp.ge.f32.partialorder %v28, 0.25541282
    %vm193 = vcmp.ge.f32.partialorder %v29, 0.25541282
    %v194 = vsel %vm186, 1, 0
    %v195 = vsel %vm187, 1, 0
    %v196 = vsel %vm188, 1, 0
    %v197 = vsel %vm189, 1, 0
    %v198 = vsel %vm190, 1, 0
    %v199 = vsel %vm191, 1, 0
    %v200 = vsel %vm192, 1, 0
    %v201 = vsel %vm193, 1, 0
    %v202 = vcvt.s32.f32 %v194
    %v203 = vcvt.s32.f32 %v195
    %v204 = vcvt.s32.f32 %v196
    %v205 = vcvt.s32.f32 %v197
    %v206 = vcvt.s32.f32 %v198
    %v207 = vcvt.s32.f32 %v199
    %v208 = vcvt.s32.f32 %v200
    %v209 = vcvt.s32.f32 %v201
    %v210 = vadd.f32 %v202, %v203
    %211 = vadd.xlane.f32.xlu0 %v210
    %v212 = vpop.xlane.xlu0 %211
    %v213 = vadd.f32 %v204, %v205
    %214 = vadd.xlane.f32.xlu0 %v213
    %v215 = vpop.xlane.xlu0 %214
    %v216 = vadd.f32 %v206, %v207
    %217 = vadd.xlane.f32.xlu0 %v216
    %v218 = vpop.xlane.xlu0 %217
    %v219 = vadd.f32 %v208, %v209
    %220 = vadd.xlane.f32.xlu0 %v219
    %v221 = vpop.xlane.xlu0 %220
    %vm222 = vcmp.ge.f32.partialorder %v22, 0.36544377
    %vm223 = vcmp.ge.f32.partialorder %v23, 0.36544377
    %vm224 = vcmp.ge.f32.partialorder %v24, 0.36544377
    %vm225 = vcmp.ge.f32.partialorder %v25, 0.36544377
    %vm226 = vcmp.ge.f32.partialorder %v26, 0.36544377
    %vm227 = vcmp.ge.f32.partialorder %v27, 0.36544377
    %vm228 = vcmp.ge.f32.partialorder %v28, 0.36544377
    %vm229 = vcmp.ge.f32.partialorder %v29, 0.36544377
    %v230 = vsel %vm222, 1, 0
    %v231 = vsel %vm223, 1, 0
    %v232 = vsel %vm224, 1, 0
    %v233 = vsel %vm225, 1, 0
    %v234 = vsel %vm226, 1, 0
    %v235 = vsel %vm227, 1, 0
    %v236 = vsel %vm228, 1, 0
    %v237 = vsel %vm229, 1, 0
    %v238 = vcvt.s32.f32 %v230
    %v239 = vcvt.s32.f32 %v231
    %v240 = vcvt.s32.f32 %v232
    %v241 = vcvt.s32.f32 %v233
    %v242 = vcvt.s32.f32 %v234
    %v243 = vcvt.s32.f32 %v235
    %v244 = vcvt.s32.f32 %v236
    %v245 = vcvt.s32.f32 %v237
    %v246 = vadd.f32 %v238, %v239
    %247 = vadd.xlane.f32.xlu0 %v246
    %v248 = vpop.xlane.xlu0 %247
    %v249 = vadd.f32 %v240, %v241
    %250 = vadd.xlane.f32.xlu0 %v249
    %v251 = vpop.xlane.xlu0 %250
    %v252 = vadd.f32 %v242, %v243
    %253 = vadd.xlane.f32.xlu0 %v252
    %v254 = vpop.xlane.xlu0 %253
    %v255 = vadd.f32 %v244, %v245
    %256 = vadd.xlane.f32.xlu0 %v255
    %v257 = vpop.xlane.xlu0 %256
    %vm258 = vcmp.ge.f32.partialorder %v22, 0.4847003
    %vm259 = vcmp.ge.f32.partialorder %v23, 0.4847003
    %vm260 = vcmp.ge.f32.partialorder %v24, 0.4847003
    %vm261 = vcmp.ge.f32.partialorder %v25, 0.4847003
    %vm262 = vcmp.ge.f32.partialorder %v26, 0.4847003
    %vm263 = vcmp.ge.f32.partialorder %v27, 0.4847003
    %vm264 = vcmp.ge.f32.partialorder %v28, 0.4847003
    %vm265 = vcmp.ge.f32.partialorder %v29, 0.4847003
    %v266 = vsel %vm258, 1, 0
    %v267 = vsel %vm259, 1, 0
    %v268 = vsel %vm260, 1, 0
    %v269 = vsel %vm261, 1, 0
    %v270 = vsel %vm262, 1, 0
    %v271 = vsel %vm263, 1, 0
    %v272 = vsel %vm264, 1, 0
    %v273 = vsel %vm265, 1, 0
    %v274 = vcvt.s32.f32 %v266
    %v275 = vcvt.s32.f32 %v267
    %v276 = vcvt.s32.f32 %v268
    %v277 = vcvt.s32.f32 %v269
    %v278 = vcvt.s32.f32 %v270
    %v279 = vcvt.s32.f32 %v271
    %v280 = vcvt.s32.f32 %v272
    %v281 = vcvt.s32.f32 %v273
    %v282 = vadd.f32 %v274, %v275
    %283 = vadd.xlane.f32.xlu0 %v282
    %v284 = vpop.xlane.xlu0 %283
    %v285 = vadd.f32 %v276, %v277
    %286 = vadd.xlane.f32.xlu0 %v285
    %v287 = vpop.xlane.xlu0 %286
    %v288 = vadd.f32 %v278, %v279
    %289 = vadd.xlane.f32.xlu0 %v288
    %v290 = vpop.xlane.xlu0 %289
    %v291 = vadd.f32 %v280, %v281
    %292 = vadd.xlane.f32.xlu0 %v291
    %v293 = vpop.xlane.xlu0 %292
    %vm294 = vcmp.ge.f32.partialorder %v22, 0.6183813
    %vm295 = vcmp.ge.f32.partialorder %v23, 0.6183813
    %vm296 = vcmp.ge.f32.partialorder %v24, 0.6183813
    %vm297 = vcmp.ge.f32.partialorder %v25, 0.6183813
    %vm298 = vcmp.ge.f32.partialorder %v26, 0.6183813
    %vm299 = vcmp.ge.f32.partialorder %v27, 0.6183813
    %vm300 = vcmp.ge.f32.partialorder %v28, 0.6183813
    %vm301 = vcmp.ge.f32.partialorder %v29, 0.6183813
    %v302 = vsel %vm294, 1, 0
    %v303 = vsel %vm295, 1, 0
    %v304 = vsel %vm296, 1, 0
    %v305 = vsel %vm297, 1, 0
    %v306 = vsel %vm298, 1, 0
    %v307 = vsel %vm299, 1, 0
    %v308 = vsel %vm300, 1, 0
    %v309 = vsel %vm301, 1, 0
    %v310 = vcvt.s32.f32 %v302
    %v311 = vcvt.s32.f32 %v303
    %v312 = vcvt.s32.f32 %v304
    %v313 = vcvt.s32.f32 %v305
    %v314 = vcvt.s32.f32 %v306
    %v315 = vcvt.s32.f32 %v307
    %v316 = vcvt.s32.f32 %v308
    %v317 = vcvt.s32.f32 %v309
    %v318 = vadd.f32 %v310, %v311
    %319 = vadd.xlane.f32.xlu0 %v318
    %v320 = vpop.xlane.xlu0 %319
    %v321 = vadd.f32 %v312, %v313
    %322 = vadd.xlane.f32.xlu0 %v321
    %v323 = vpop.xlane.xlu0 %322
    %v324 = vadd.f32 %v314, %v315
    %325 = vadd.xlane.f32.xlu0 %v324
    %v326 = vpop.xlane.xlu0 %325
    %v327 = vadd.f32 %v316, %v317
    %328 = vadd.xlane.f32.xlu0 %v327
    %v329 = vpop.xlane.xlu0 %328
    %vm330 = vcmp.ge.f32.partialorder %v22, 0.7752987
    %vm331 = vcmp.ge.f32.partialorder %v23, 0.7752987
    %vm332 = vcmp.ge.f32.partialorder %v24, 0.7752987
    %vm333 = vcmp.ge.f32.partialorder %v25, 0.7752987
    %vm334 = vcmp.ge.f32.partialorder %v26, 0.7752987
    %vm335 = vcmp.ge.f32.partialorder %v27, 0.7752987
    %vm336 = vcmp.ge.f32.partialorder %v28, 0.7752987
    %vm337 = vcmp.ge.f32.partialorder %v29, 0.7752987
    %v338 = vsel %vm330, 1, 0
    %v339 = vsel %vm331, 1, 0
    %v340 = vsel %vm332, 1, 0
    %v341 = vsel %vm333, 1, 0
    %v342 = vsel %vm334, 1, 0
    %v343 = vsel %vm335, 1, 0
    %v344 = vsel %vm336, 1, 0
    %v345 = vsel %vm337, 1, 0
    %v346 = vcvt.s32.f32 %v338
    %v347 = vcvt.s32.f32 %v339
    %v348 = vcvt.s32.f32 %v340
    %v349 = vcvt.s32.f32 %v341
    %v350 = vcvt.s32.f32 %v342
    %v351 = vcvt.s32.f32 %v343
    %v352 = vcvt.s32.f32 %v344
    %v353 = vcvt.s32.f32 %v345
    %v354 = vadd.f32 %v346, %v347
    %355 = vadd.xlane.f32.xlu0 %v354
    %v356 = vpop.xlane.xlu0 %355
    %v357 = vadd.f32 %v348, %v349
    %358 = vadd.xlane.f32.xlu0 %v357
    %v359 = vpop.xlane.xlu0 %358
    %v360 = vadd.f32 %v350, %v351
    %361 = vadd.xlane.f32.xlu0 %v360
    %v362 = vpop.xlane.xlu0 %361
    %v363 = vadd.f32 %v352, %v353
    %364 = vadd.xlane.f32.xlu0 %v363
    %v365 = vpop.xlane.xlu0 %364
    %vm366 = vcmp.ge.f32.partialorder %v22, 0.97295505
    %vm367 = vcmp.ge.f32.partialorder %v23, 0.97295505
    %vm368 = vcmp.ge.f32.partialorder %v24, 0.97295505
    %vm369 = vcmp.ge.f32.partialorder %v25, 0.97295505
    %vm370 = vcmp.ge.f32.partialorder %v26, 0.97295505
    %vm371 = vcmp.ge.f32.partialorder %v27, 0.97295505
    %vm372 = vcmp.ge.f32.partialorder %v28, 0.97295505
    %vm373 = vcmp.ge.f32.partialorder %v29, 0.97295505
    %v374 = vsel %vm366, 1, 0
    %v375 = vsel %vm367, 1, 0
    %v376 = vsel %vm368, 1, 0
    %v377 = vsel %vm369, 1, 0
    %v378 = vsel %vm370, 1, 0
    %v379 = vsel %vm371, 1, 0
    %v380 = vsel %vm372, 1, 0
    %v381 = vsel %vm373, 1, 0
    %v382 = vcvt.s32.f32 %v374
    %v383 = vcvt.s32.f32 %v375
    %v384 = vcvt.s32.f32 %v376
    %v385 = vcvt.s32.f32 %v377
    %v386 = vcvt.s32.f32 %v378
    %v387 = vcvt.s32.f32 %v379
    %v388 = vcvt.s32.f32 %v380
    %v389 = vcvt.s32.f32 %v381
    %v390 = vadd.f32 %v382, %v383
    %391 = vadd.xlane.f32.xlu0 %v390
    %v392 = vpop.xlane.xlu0 %391
    %v393 = vadd.f32 %v384, %v385
    %394 = vadd.xlane.f32.xlu0 %v393
    %v395 = vpop.xlane.xlu0 %394
    %v396 = vadd.f32 %v386, %v387
    %397 = vadd.xlane.f32.xlu0 %v396
    %v398 = vpop.xlane.xlu0 %397
    %v399 = vadd.f32 %v388, %v389
    %400 = vadd.xlane.f32.xlu0 %v399
    %v401 = vpop.xlane.xlu0 %400
    %vm402 = vcmp.ge.f32.partialorder %v22, 1.2561529
    %vm403 = vcmp.ge.f32.partialorder %v23, 1.2561529
    %vm404 = vcmp.ge.f32.partialorder %v24, 1.2561529
    %vm405 = vcmp.ge.f32.partialorder %v25, 1.2561529
    %vm406 = vcmp.ge.f32.partialorder %v26, 1.2561529
    %vm407 = vcmp.ge.f32.partialorder %v27, 1.2561529
    %vm408 = vcmp.ge.f32.partialorder %v28, 1.2561529
    %vm409 = vcmp.ge.f32.partialorder %v29, 1.2561529
    %v410 = vsel %vm402, 1, 0
    %v411 = vsel %vm403, 1, 0
    %v412 = vsel %vm404, 1, 0
    %v413 = vsel %vm405, 1, 0
    %v414 = vsel %vm406, 1, 0
    %v415 = vsel %vm407, 1, 0
    %v416 = vsel %vm408, 1, 0
    %v417 = vsel %vm409, 1, 0
    %v418 = vcvt.s32.f32 %v410
    %v419 = vcvt.s32.f32 %v411
    %v420 = vcvt.s32.f32 %v412
    %v421 = vcvt.s32.f32 %v413
    %v422 = vcvt.s32.f32 %v414
    %v423 = vcvt.s32.f32 %v415
    %v424 = vcvt.s32.f32 %v416
    %v425 = vcvt.s32.f32 %v417
    %v426 = vadd.f32 %v418, %v419
    %427 = vadd.xlane.f32.xlu0 %v426
    %v428 = vpop.xlane.xlu0 %427
    %v429 = vadd.f32 %v420, %v421
    %430 = vadd.xlane.f32.xlu0 %v429
    %v431 = vpop.xlane.xlu0 %430
    %v432 = vadd.f32 %v422, %v423
    %433 = vadd.xlane.f32.xlu0 %v432
    %v434 = vpop.xlane.xlu0 %433
    %v435 = vadd.f32 %v424, %v425
    %436 = vadd.xlane.f32.xlu0 %v435
    %v437 = vpop.xlane.xlu0 %436
    %vm438 = vcmp.ge.f32.partialorder %v22, 1.8317808
    %vm439 = vcmp.ge.f32.partialorder %v23, 1.8317808
    %vm440 = vcmp.ge.f32.partialorder %v24, 1.8317808
    %vm441 = vcmp.ge.f32.partialorder %v25, 1.8317808
    %vm442 = vcmp.ge.f32.partialorder %v26, 1.8317808
    %vm443 = vcmp.ge.f32.partialorder %v27, 1.8317808
    %vm444 = vcmp.ge.f32.partialorder %v28, 1.8317808
    %vm445 = vcmp.ge.f32.partialorder %v29, 1.8317808
    %v446 = vsel %vm438, 1, 0
    %v447 = vsel %vm439, 1, 0
    %v448 = vsel %vm440, 1, 0
    %v449 = vsel %vm441, 1, 0
    %v450 = vsel %vm442, 1, 0
    %v451 = vsel %vm443, 1, 0
    %v452 = vsel %vm444, 1, 0
    %v453 = vsel %vm445, 1, 0
    %v454 = vcvt.s32.f32 %v446
    %v455 = vcvt.s32.f32 %v447
    %v456 = vcvt.s32.f32 %v448
    %v457 = vcvt.s32.f32 %v449
    %v458 = vcvt.s32.f32 %v450
    %v459 = vcvt.s32.f32 %v451
    %v460 = vcvt.s32.f32 %v452
    %v461 = vcvt.s32.f32 %v453
    %v462 = vadd.f32 %v454, %v455
    %463 = vadd.xlane.f32.xlu0 %v462
    %v464 = vpop.xlane.xlu0 %463
    %v465 = vadd.f32 %v456, %v457
    %466 = vadd.xlane.f32.xlu0 %v465
    %v467 = vpop.xlane.xlu0 %466
    %v468 = vadd.f32 %v458, %v459
    %469 = vadd.xlane.f32.xlu0 %v468
    %v470 = vpop.xlane.xlu0 %469
    %v471 = vadd.f32 %v460, %v461
    %472 = vadd.xlane.f32.xlu0 %v471
    %v473 = vpop.xlane.xlu0 %472
    %v474 = vsub.f32 %v104, %v140
    %v475 = vsub.f32 %v107, %v143
    %v476 = vsub.f32 %v110, %v146
    %v477 = vsub.f32 %v113, %v149
    %vm478 = vcmp.gt.f32.partialorder %v474, 0.0
    %vm479 = vcmp.gt.f32.partialorder %v475, 0.0
    %vm480 = vcmp.gt.f32.partialorder %v476, 0.0
    %vm481 = vcmp.gt.f32.partialorder %v477, 0.0
    %v482 = vsel %vm478, %v474, 1.0
    %v483 = vsel %vm479, %v475, 1.0
    %v484 = vsel %vm480, %v476, 1.0
    %v485 = vsel %vm481, %v477, 1.0
    %v486 = vlog2.pop %v482
    %v487 = vmul.f32 %v486, 0.6931472
    %v488 = vlog2.pop %v483
    %v489 = vmul.f32 %v488, 0.6931472
    %v490 = vlog2.pop %v484
    %v491 = vmul.f32 %v490, 0.6931472
    %v492 = vlog2.pop %v485
    %v493 = vmul.f32 %v492, 0.6931472
    %v494 = vmul.f32 %v474, %v487
    %v495 = vmul.f32 %v475, %v489
    %v496 = vmul.f32 %v476, %v491
    %v497 = vmul.f32 %v477, %v493
    %v498 = vadd.f32 %v494, 0.0
    %v499 = vadd.f32 %v495, 0.0
    %v500 = vadd.f32 %v496, 0.0
    %v501 = vadd.f32 %v497, 0.0
    %v502 = vsub.f32 %v140, %v176
    %v503 = vsub.f32 %v143, %v179
    %v504 = vsub.f32 %v146, %v182
    %v505 = vsub.f32 %v149, %v185
    %vm506 = vcmp.gt.f32.partialorder %v502, 0.0
    %vm507 = vcmp.gt.f32.partialorder %v503, 0.0
    %vm508 = vcmp.gt.f32.partialorder %v504, 0.0
    %vm509 = vcmp.gt.f32.partialorder %v505, 0.0
    %v510 = vsel %vm506, %v502, 1.0
    %v511 = vsel %vm507, %v503, 1.0
    %v512 = vsel %vm508, %v504, 1.0
    %v513 = vsel %vm509, %v505, 1.0
    %v514 = vlog2.pop %v510
    %v515 = vmul.f32 %v514, 0.6931472
    %v516 = vlog2.pop %v511
    %v517 = vmul.f32 %v516, 0.6931472
    %v518 = vlog2.pop %v512
    %v519 = vmul.f32 %v518, 0.6931472
    %v520 = vlog2.pop %v513
    %v521 = vmul.f32 %v520, 0.6931472
    %v522 = vmul.f32 %v502, %v515
    %v523 = vmul.f32 %v503, %v517
    %v524 = vmul.f32 %v504, %v519
    %v525 = vmul.f32 %v505, %v521
    %v526 = vadd.f32 %v498, %v522
    %v527 = vadd.f32 %v499, %v523
    %v528 = vadd.f32 %v500, %v524
    %v529 = vadd.f32 %v501, %v525
    %v530 = vsub.f32 %v176, %v212
    %v531 = vsub.f32 %v179, %v215
    %v532 = vsub.f32 %v182, %v218
    %v533 = vsub.f32 %v185, %v221
    %vm534 = vcmp.gt.f32.partialorder %v530, 0.0
    %vm535 = vcmp.gt.f32.partialorder %v531, 0.0
    %vm536 = vcmp.gt.f32.partialorder %v532, 0.0
    %vm537 = vcmp.gt.f32.partialorder %v533, 0.0
    %v538 = vsel %vm534, %v530, 1.0
    %v539 = vsel %vm535, %v531, 1.0
    %v540 = vsel %vm536, %v532, 1.0
    %v541 = vsel %vm537, %v533, 1.0
    %v542 = vlog2.pop %v538
    %v543 = vmul.f32 %v542, 0.6931472
    %v544 = vlog2.pop %v539
    %v545 = vmul.f32 %v544, 0.6931472
    %v546 = vlog2.pop %v540
    %v547 = vmul.f32 %v546, 0.6931472
    %v548 = vlog2.pop %v541
    %v549 = vmul.f32 %v548, 0.6931472
    %v550 = vmul.f32 %v530, %v543
    %v551 = vmul.f32 %v531, %v545
    %v552 = vmul.f32 %v532, %v547
    %v553 = vmul.f32 %v533, %v549
    %v554 = vadd.f32 %v526, %v550
    %v555 = vadd.f32 %v527, %v551
    %v556 = vadd.f32 %v528, %v552
    %v557 = vadd.f32 %v529, %v553
    %v558 = vsub.f32 %v212, %v248
    %v559 = vsub.f32 %v215, %v251
    %v560 = vsub.f32 %v218, %v254
    %v561 = vsub.f32 %v221, %v257
    %vm562 = vcmp.gt.f32.partialorder %v558, 0.0
    %vm563 = vcmp.gt.f32.partialorder %v559, 0.0
    %vm564 = vcmp.gt.f32.partialorder %v560, 0.0
    %vm565 = vcmp.gt.f32.partialorder %v561, 0.0
    %v566 = vsel %vm562, %v558, 1.0
    %v567 = vsel %vm563, %v559, 1.0
    %v568 = vsel %vm564, %v560, 1.0
    %v569 = vsel %vm565, %v561, 1.0
    %v570 = vlog2.pop %v566
    %v571 = vmul.f32 %v570, 0.6931472
    %v572 = vlog2.pop %v567
    %v573 = vmul.f32 %v572, 0.6931472
    %v574 = vlog2.pop %v568
    %v575 = vmul.f32 %v574, 0.6931472
    %v576 = vlog2.pop %v569
    %v577 = vmul.f32 %v576, 0.6931472
    %v578 = vmul.f32 %v558, %v571
    %v579 = vmul.f32 %v559, %v573
    %v580 = vmul.f32 %v560, %v575
    %v581 = vmul.f32 %v561, %v577
    %v582 = vadd.f32 %v554, %v578
    %v583 = vadd.f32 %v555, %v579
    %v584 = vadd.f32 %v556, %v580
    %v585 = vadd.f32 %v557, %v581
    %v586 = vsub.f32 %v248, %v284
    %v587 = vsub.f32 %v251, %v287
    %v588 = vsub.f32 %v254, %v290
    %v589 = vsub.f32 %v257, %v293
    %vm590 = vcmp.gt.f32.partialorder %v586, 0.0
    %vm591 = vcmp.gt.f32.partialorder %v587, 0.0
    %vm592 = vcmp.gt.f32.partialorder %v588, 0.0
    %vm593 = vcmp.gt.f32.partialorder %v589, 0.0
    %v594 = vsel %vm590, %v586, 1.0
    %v595 = vsel %vm591, %v587, 1.0
    %v596 = vsel %vm592, %v588, 1.0
    %v597 = vsel %vm593, %v589, 1.0
    %v598 = vlog2.pop %v594
    %v599 = vmul.f32 %v598, 0.6931472
    %v600 = vlog2.pop %v595
    %v601 = vmul.f32 %v600, 0.6931472
    %v602 = vlog2.pop %v596
    %v603 = vmul.f32 %v602, 0.6931472
    %v604 = vlog2.pop %v597
    %v605 = vmul.f32 %v604, 0.6931472
    %v606 = vmul.f32 %v586, %v599
    %v607 = vmul.f32 %v587, %v601
    %v608 = vmul.f32 %v588, %v603
    %v609 = vmul.f32 %v589, %v605
    %v610 = vadd.f32 %v582, %v606
    %v611 = vadd.f32 %v583, %v607
    %v612 = vadd.f32 %v584, %v608
    %v613 = vadd.f32 %v585, %v609
    %v614 = vsub.f32 %v284, %v320
    %v615 = vsub.f32 %v287, %v323
    %v616 = vsub.f32 %v290, %v326
    %v617 = vsub.f32 %v293, %v329
    %vm618 = vcmp.gt.f32.partialorder %v614, 0.0
    %vm619 = vcmp.gt.f32.partialorder %v615, 0.0
    %vm620 = vcmp.gt.f32.partialorder %v616, 0.0
    %vm621 = vcmp.gt.f32.partialorder %v617, 0.0
    %v622 = vsel %vm618, %v614, 1.0
    %v623 = vsel %vm619, %v615, 1.0
    %v624 = vsel %vm620, %v616, 1.0
    %v625 = vsel %vm621, %v617, 1.0
    %v626 = vlog2.pop %v622
    %v627 = vmul.f32 %v626, 0.6931472
    %v628 = vlog2.pop %v623
    %v629 = vmul.f32 %v628, 0.6931472
    %v630 = vlog2.pop %v624
    %v631 = vmul.f32 %v630, 0.6931472
    %v632 = vlog2.pop %v625
    %v633 = vmul.f32 %v632, 0.6931472
    %v634 = vmul.f32 %v614, %v627
    %v635 = vmul.f32 %v615, %v629
    %v636 = vmul.f32 %v616, %v631
    %v637 = vmul.f32 %v617, %v633
    %v638 = vadd.f32 %v610, %v634
    %v639 = vadd.f32 %v611, %v635
    %v640 = vadd.f32 %v612, %v636
    %v641 = vadd.f32 %v613, %v637
    %v642 = vsub.f32 %v320, %v356
    %v643 = vsub.f32 %v323, %v359
    %v644 = vsub.f32 %v326, %v362
    %v645 = vsub.f32 %v329, %v365
    %vm646 = vcmp.gt.f32.partialorder %v642, 0.0
    %vm647 = vcmp.gt.f32.partialorder %v643, 0.0
    %vm648 = vcmp.gt.f32.partialorder %v644, 0.0
    %vm649 = vcmp.gt.f32.partialorder %v645, 0.0
    %v650 = vsel %vm646, %v642, 1.0
    %v651 = vsel %vm647, %v643, 1.0
    %v652 = vsel %vm648, %v644, 1.0
    %v653 = vsel %vm649, %v645, 1.0
    %v654 = vlog2.pop %v650
    %v655 = vmul.f32 %v654, 0.6931472
    %v656 = vlog2.pop %v651
    %v657 = vmul.f32 %v656, 0.6931472
    %v658 = vlog2.pop %v652
    %v659 = vmul.f32 %v658, 0.6931472
    %v660 = vlog2.pop %v653
    %v661 = vmul.f32 %v660, 0.6931472
    %v662 = vmul.f32 %v642, %v655
    %v663 = vmul.f32 %v643, %v657
    %v664 = vmul.f32 %v644, %v659
    %v665 = vmul.f32 %v645, %v661
    %v666 = vadd.f32 %v638, %v662
    %v667 = vadd.f32 %v639, %v663
    %v668 = vadd.f32 %v640, %v664
    %v669 = vadd.f32 %v641, %v665
    %v670 = vsub.f32 %v356, %v392
    %v671 = vsub.f32 %v359, %v395
    %v672 = vsub.f32 %v362, %v398
    %v673 = vsub.f32 %v365, %v401
    %vm674 = vcmp.gt.f32.partialorder %v670, 0.0
    %vm675 = vcmp.gt.f32.partialorder %v671, 0.0
    %vm676 = vcmp.gt.f32.partialorder %v672, 0.0
    %vm677 = vcmp.gt.f32.partialorder %v673, 0.0
    %v678 = vsel %vm674, %v670, 1.0
    %v679 = vsel %vm675, %v671, 1.0
    %v680 = vsel %vm676, %v672, 1.0
    %v681 = vsel %vm677, %v673, 1.0
    %v682 = vlog2.pop %v678
    %v683 = vmul.f32 %v682, 0.6931472
    %v684 = vlog2.pop %v679
    %v685 = vmul.f32 %v684, 0.6931472
    %v686 = vlog2.pop %v680
    %v687 = vmul.f32 %v686, 0.6931472
    %v688 = vlog2.pop %v681
    %v689 = vmul.f32 %v688, 0.6931472
    %v690 = vmul.f32 %v670, %v683
    %v691 = vmul.f32 %v671, %v685
    %v692 = vmul.f32 %v672, %v687
    %v693 = vmul.f32 %v673, %v689
    %v694 = vadd.f32 %v666, %v690
    %v695 = vadd.f32 %v667, %v691
    %v696 = vadd.f32 %v668, %v692
    %v697 = vadd.f32 %v669, %v693
    %v698 = vsub.f32 %v392, %v428
    %v699 = vsub.f32 %v395, %v431
    %v700 = vsub.f32 %v398, %v434
    %v701 = vsub.f32 %v401, %v437
    %vm702 = vcmp.gt.f32.partialorder %v698, 0.0
    %vm703 = vcmp.gt.f32.partialorder %v699, 0.0
    %vm704 = vcmp.gt.f32.partialorder %v700, 0.0
    %vm705 = vcmp.gt.f32.partialorder %v701, 0.0
    %v706 = vsel %vm702, %v698, 1.0
    %v707 = vsel %vm703, %v699, 1.0
    %v708 = vsel %vm704, %v700, 1.0
    %v709 = vsel %vm705, %v701, 1.0
    %v710 = vlog2.pop %v706
    %v711 = vmul.f32 %v710, 0.6931472
    %v712 = vlog2.pop %v707
    %v713 = vmul.f32 %v712, 0.6931472
    %v714 = vlog2.pop %v708
    %v715 = vmul.f32 %v714, 0.6931472
    %v716 = vlog2.pop %v709
    %v717 = vmul.f32 %v716, 0.6931472
    %v718 = vmul.f32 %v698, %v711
    %v719 = vmul.f32 %v699, %v713
    %v720 = vmul.f32 %v700, %v715
    %v721 = vmul.f32 %v701, %v717
    %v722 = vadd.f32 %v694, %v718
    %v723 = vadd.f32 %v695, %v719
    %v724 = vadd.f32 %v696, %v720
    %v725 = vadd.f32 %v697, %v721
    %v726 = vsub.f32 %v428, %v464
    %v727 = vsub.f32 %v431, %v467
    %v728 = vsub.f32 %v434, %v470
    %v729 = vsub.f32 %v437, %v473
    %vm730 = vcmp.gt.f32.partialorder %v726, 0.0
    %vm731 = vcmp.gt.f32.partialorder %v727, 0.0
    %vm732 = vcmp.gt.f32.partialorder %v728, 0.0
    %vm733 = vcmp.gt.f32.partialorder %v729, 0.0
    %v734 = vsel %vm730, %v726, 1.0
    %v735 = vsel %vm731, %v727, 1.0
    %v736 = vsel %vm732, %v728, 1.0
    %v737 = vsel %vm733, %v729, 1.0
    %v738 = vlog2.pop %v734
    %v739 = vmul.f32 %v738, 0.6931472
    %v740 = vlog2.pop %v735
    %v741 = vmul.f32 %v740, 0.6931472
    %v742 = vlog2.pop %v736
    %v743 = vmul.f32 %v742, 0.6931472
    %v744 = vlog2.pop %v737
    %v745 = vmul.f32 %v744, 0.6931472
    %v746 = vmul.f32 %v726, %v739
    %v747 = vmul.f32 %v727, %v741
    %v748 = vmul.f32 %v728, %v743
    %v749 = vmul.f32 %v729, %v745
    %v750 = vadd.f32 %v722, %v746
    %v751 = vadd.f32 %v723, %v747
    %v752 = vadd.f32 %v724, %v748
    %v753 = vadd.f32 %v725, %v749
    %vm754 = vcmp.gt.f32.partialorder %v464, 0.0
    %vm755 = vcmp.gt.f32.partialorder %v467, 0.0
    %vm756 = vcmp.gt.f32.partialorder %v470, 0.0
    %vm757 = vcmp.gt.f32.partialorder %v473, 0.0
    %v758 = vsel %vm754, %v464, 1.0
    %v759 = vsel %vm755, %v467, 1.0
    %v760 = vsel %vm756, %v470, 1.0
    %v761 = vsel %vm757, %v473, 1.0
    %v762 = vlog2.pop %v758
    %v763 = vmul.f32 %v762, 0.6931472
    %v764 = vlog2.pop %v759
    %v765 = vmul.f32 %v764, 0.6931472
    %v766 = vlog2.pop %v760
    %v767 = vmul.f32 %v766, 0.6931472
    %v768 = vlog2.pop %v761
    %v769 = vmul.f32 %v768, 0.6931472
    %v770 = vmul.f32 %v464, %v763
    %v771 = vmul.f32 %v467, %v765
    %v772 = vmul.f32 %v470, %v767
    %v773 = vmul.f32 %v473, %v769
    %v774 = vadd.f32 %v750, %v770
    %v775 = vadd.f32 %v751, %v771
    %v776 = vadd.f32 %v752, %v772
    %v777 = vadd.f32 %v753, %v773
    %v778 = vlog2.pop %v104
    %v779 = vmul.f32 %v778, 0.6931472
    %v780 = vlog2.pop %v107
    %v781 = vmul.f32 %v780, 0.6931472
    %v782 = vlog2.pop %v110
    %v783 = vmul.f32 %v782, 0.6931472
    %v784 = vlog2.pop %v113
    %v785 = vmul.f32 %v784, 0.6931472
    %v786 = vrcp.pop %v104
    %v787 = vmul.f32 %v774, %v786
    %v788 = vrcp.pop %v107
    %v789 = vmul.f32 %v775, %v788
    %v790 = vrcp.pop %v110
    %v791 = vmul.f32 %v776, %v790
    %v792 = vrcp.pop %v113
    %v793 = vmul.f32 %v777, %v792
    %v794 = vsub.f32 %v779, %v787
    %v795 = vsub.f32 %v781, %v789
    %v796 = vsub.f32 %v783, %v791
    %v797 = vsub.f32 %v785, %v793
    %v798 = vadd.f32 %v74, 1e-07
    %v799 = vadd.f32 %v75, 1e-07
    %v800 = vadd.f32 %v76, 1e-07
    %v801 = vadd.f32 %v77, 1e-07
    %v802 = vrcp.pop %v798
    %v803 = vmul.f32 2.0, %v802
    %v804 = vrcp.pop %v799
    %v805 = vmul.f32 2.0, %v804
    %v806 = vrcp.pop %v800
    %v807 = vmul.f32 2.0, %v806
    %v808 = vrcp.pop %v801
    %v809 = vmul.f32 2.0, %v808
    %v810 = vadd.f32 %v794, %v803
    %v811 = vadd.f32 %v795, %v805
    %v812 = vadd.f32 %v796, %v807
    %v813 = vadd.f32 %v797, %v809
    %vm814 = vcmask 7168
    %815 = vst.msk [vmem:[%s1] sm:$0xff] %vm814, %v810
    %816 = vst.msk [vmem:[%s1 + $0x8] sm:$0xff] %vm814, %v811
    %817 = vst.msk [vmem:[%s1 + $0x10] sm:$0xff] %vm814, %v812
    %818 = vst.msk [vmem:[%s1 + $0x18] sm:$0xff] %vm814, %v813
    // Predicated region
    $region10: #{tpu_custom_call.1} parent=1 // pred_check
      _
    $region11: #{tpu_custom_call.1} parent=1 // pred_check_branch
      %820 = sbr.rel (0) target = $region13
    $region12: #{tpu_custom_call.1} parent=1 // pred_region
      _
    $region13: #{tpu_custom_call.1} parent=1 // pred_fallthru
      _
    // Predicated region
    $region14: #{tpu_custom_call.1} parent=1 // pred_check
      _
    $region15: #{tpu_custom_call.1} parent=1 // pred_check_branch
      %822 = sbr.rel (0) target = $region17
    $region16: #{tpu_custom_call.1} parent=1 // pred_region
      _
    $region17: #{tpu_custom_call.1} parent=1 // pred_fallthru
      _
    %823 = vsyncpa [#allocation3], 1

</llo_original>
